<compile_context>
chip_gen: v6e
topology: v6e:2x2x1
jax: 0.10.0
libtpu: 0.0.40
codegen_flags: <defaults>
</compile_context>

<pallas_src>
import jax
import jax.numpy as jnp
from jax.experimental import pallas as pl
from jax.experimental.pallas import tpu as pltpu


def lavip_clip_kernel(nvalid_ref, x_ref, wenc_ref, text_t_ref, pfeat_ref,
                      scale_ref, logits_ref):
    # nvalid_ref : (1,) int32 SMEM   number of real classes (rest are padding)
    # x_ref      : (TB, Kp) bf16     patch-mean-pooled image tile
    # wenc_ref   : (Kp, Ep) bf16     fused encoder weight (w_patch @ w_proj)
    # text_t_ref : (Ep, Np) bf16     pre-transposed, pre-normalized text feats
    # pfeat_ref  : (Np, Ep) bf16     per-class prompt features (pooled+encoded)
    # scale_ref  : (1,) f32 SMEM     exp(logit_scale), pre-exponentiated
    # logits_ref : (TB, Np) f32      output logits tile (lane-dense)
    x = x_ref[...]                       # (TB, Kp) bf16
    wenc = wenc_ref[...]                 # (Kp, Ep) bf16
    text_t = text_t_ref[...]             # (Ep, Np) bf16

    def l2norm(f):
        inv = jax.lax.rsqrt(jnp.sum(f * f, axis=-1, keepdims=True) + 1e-12)
        return f * inv

    # (1) frozen conditioning pass: single fused encoder matmul, f32 accum.
    f1_un = jnp.dot(x, wenc, preferred_element_type=jnp.float32)        # (TB, Ep)
    cond = l2norm(f1_un)

    # (2) prompter: text-conditioned softmax mixture over classes (f32 softmax).
    sim = jnp.dot(cond.astype(jnp.bfloat16), text_t,
                  preferred_element_type=jnp.float32)                   # (TB, Np)
    n_valid = nvalid_ref[0]
    lane = jax.lax.broadcasted_iota(jnp.int32, sim.shape, 1)
    sim = jnp.where(lane < n_valid, sim, -1e30)        # mask padded classes
    m = jnp.max(sim, axis=-1, keepdims=True)
    e = jnp.exp(sim - m)
    attn = e / jnp.sum(e, axis=-1, keepdims=True)

    # (3) prompted-image features via linearity of the stand-in encoder:
    #     enc(x + delta) = enc(x) + attn @ enc(prompts_pooled)
    delta_feat = jnp.dot(attn.astype(jnp.bfloat16), pfeat_ref[...],
                         preferred_element_type=jnp.float32)            # (TB, Ep)
    feats = l2norm(f1_un + delta_feat)

    # (4) logits — full-lane (TB, Np) store; padded class columns are zero.
    logits_ref[...] = scale_ref[0] * jnp.dot(feats.astype(jnp.bfloat16), text_t,
                                             preferred_element_type=jnp.float32)


def _round_up(n, m):
    return ((n + m - 1) // m) * m


def _pad2(x, r, c):
    return jnp.pad(x, ((0, r - x.shape[0]), (0, c - x.shape[1])))


def _pick_tb(b_rounded8):
    """Batch tile: big enough to feed the MXU, but keep >=2 grid steps when
    possible so v7x's two TensorCores both get work."""
    tb = min(128, b_rounded8)
    if b_rounded8 // tb < 2 and b_rounded8 >= 16:
        tb = _round_up(b_rounded8 // 2, 8)
    return max(tb, 8)


def custom_clip_forward(image, params):
    """image: (B, C, H, W) float32 NCHW (like PyTorch). Returns (B, n_cls) f32 logits."""
    B, C, H, W = image.shape
    ph = params['patch_size']
    gh, gw = H // ph, W // ph
    P, K = gh * gw, C * ph * ph

    # ---- layout glue (pure JAX, f32): patchify + mean-pool over patches ----
    patches = image.reshape(B, C, gh, ph, gw, ph)
    patches = jnp.transpose(patches, (0, 2, 4, 1, 3, 5)).reshape(B, P, K)
    x_pooled = jnp.mean(patches, axis=1)                                # (B, K)

    text = params['text_features']            # (N, E), already L2-normalized
    N, E = text.shape

    # fused linear encoder + pre-encoded prompt features (exact for the linear
    # stand-in; done once in f32, cast to bf16 at the kernel boundary)
    w_enc = params['w_patch'] @ params['w_proj']                        # (K, E)
    prompts_pooled = jnp.mean(params['prompts'], axis=1)                # (N, K)
    prompt_feats = prompts_pooled @ w_enc                               # (N, E)

    Kp = _round_up(K, 128)
    Ep = _round_up(E, 128)
    Np = _round_up(N, 128)
    tb = _pick_tb(_round_up(B, 8))
    Bp = _round_up(B, tb)

    x_p = _pad2(x_pooled, Bp, Kp).astype(jnp.bfloat16)
    wenc_p = _pad2(w_enc, Kp, Ep).astype(jnp.bfloat16)
    text_t_p = _pad2(text.T, Ep, Np).astype(jnp.bfloat16)   # transpose-free kernel
    pfeat_p = _pad2(prompt_feats, Np, Ep).astype(jnp.bfloat16)

    n_valid = jnp.array([N], jnp.int32)
    scale_exp = jnp.exp(params['logit_scale']).astype(jnp.float32)      # (1,)

    grid = (Bp // tb,)
    smem = pl.BlockSpec(memory_space=pltpu.MemorySpace.SMEM)
    const = dict(pipeline_mode=pl.Buffered(1))   # weights never change over the grid

    logits_p = pl.pallas_call(
        lavip_clip_kernel,
        out_shape=jax.ShapeDtypeStruct((Bp, Np), jnp.float32),
        grid=grid,
        in_specs=[
            smem,                                                    # n_valid
            pl.BlockSpec((tb, Kp), lambda i: (i, 0)),                # pooled patches
            pl.BlockSpec((Kp, Ep), lambda i: (0, 0), **const),       # W_enc
            pl.BlockSpec((Ep, Np), lambda i: (0, 0), **const),       # text.T
            pl.BlockSpec((Np, Ep), lambda i: (0, 0), **const),       # prompt feats
            smem,                                                    # exp(logit_scale)
        ],
        out_specs=pl.BlockSpec((tb, Np), lambda i: (i, 0)),
        compiler_params=pltpu.CompilerParams(
            dimension_semantics=("parallel",)),
    )(n_valid, x_p, wenc_p, text_t_p, pfeat_p, scale_exp)

    return logits_p[:B, :N]


def init_params(key, *, n_cls, C, H, W, patch_size, embed_dim, feat_dim):
    gh, gw = H // patch_size, W // patch_size
    P = gh * gw
    K = C * patch_size * patch_size
    k1, k2, k3, k4 = jax.random.split(key, 4)
    w_patch = jax.random.normal(k1, (K, embed_dim), jnp.float32) / jnp.sqrt(K)
    w_proj = jax.random.normal(k2, (embed_dim, feat_dim), jnp.float32) / jnp.sqrt(embed_dim)
    text = jax.random.normal(k3, (n_cls, feat_dim), jnp.float32)
    text = text / jnp.linalg.norm(text, axis=-1, keepdims=True)   # __init__ normalization
    prompts = 0.01 * jax.random.normal(k4, (n_cls, P, K), jnp.float32)
    logit_scale = jnp.array([jnp.log(1.0 / 0.07)], jnp.float32)   # CLIP init
    return dict(patch_size=patch_size, w_patch=w_patch, w_proj=w_proj,
                text_features=text, prompts=prompts, logit_scale=logit_scale)


def reference_forward(image, params):
    """Pure-JAX f32 reference of the original (un-reordered) formulation."""
    B, C, H, W = image.shape
    ph = params['patch_size']
    gh, gw = H // ph, W // ph
    P, K = gh * gw, C * ph * ph
    patches = image.reshape(B, C, gh, ph, gw, ph)
    patches = jnp.transpose(patches, (0, 2, 4, 1, 3, 5)).reshape(B, P, K)
    wp, wproj = params['w_patch'], params['w_proj']
    text = params['text_features']

    def encode(xp):
        h = jnp.einsum('bpk,kd->bpd', xp, wp)         # embed every patch
        f = jnp.mean(h, axis=1) @ wproj               # pool, then project
        return f / jnp.sqrt(jnp.sum(f * f, axis=-1, keepdims=True) + 1e-12)

    cond = encode(patches)
    sim = cond @ text.T
    attn = jax.nn.softmax(sim, axis=-1)
    delta = jnp.einsum('bn,npk->bpk', attn, params['prompts'])
    feats = encode(patches + delta)
    return jnp.exp(params['logit_scale'][0]) * (feats @ text.T)


if __name__ == "__main__":
    key = jax.random.PRNGKey(0)
    k_img, k_par = jax.random.split(key)

    B, C, H, W = 16, 3, 16, 16
    n_cls, patch_size, embed_dim, feat_dim = 8, 8, 32, 32

    image = jax.random.normal(k_img, (B, C, H, W), jnp.float32)   # NCHW like PyTorch
    params = init_params(k_par, n_cls=n_cls, C=C, H=H, W=W,
                         patch_size=patch_size, embed_dim=embed_dim,
                         feat_dim=feat_dim)

    logits = jax.block_until_ready(custom_clip_forward(image, params))
    ref = jax.block_until_ready(reference_forward(image, params))

    assert logits.shape == (B, n_cls) and logits.dtype == jnp.float32
    assert bool(jnp.all(jnp.isfinite(logits)))
    max_err = float(jnp.max(jnp.abs(logits - ref)))
    assert bool(jnp.allclose(logits, ref, atol=0.3, rtol=0.05)), max_err
    print("KERNEL_OK")
</pallas_src>

<mosaic_0001>
module attributes {stable_mosaic.version = 11 : i64} {
  func.func @lavip_clip_kernel(%arg0: i32, %arg1: memref<1xi32, #tpu.memory_space<smem>>, %arg2: memref<8x256xbf16, #tpu.memory_space<vmem>>, %arg3: memref<256x128xbf16, #tpu.memory_space<vmem>>, %arg4: memref<128x128xbf16, #tpu.memory_space<vmem>>, %arg5: memref<128x128xbf16, #tpu.memory_space<vmem>>, %arg6: memref<1xf32, #tpu.memory_space<smem>>, %arg7: memref<8x128xf32, #tpu.memory_space<vmem>>) attributes {dimension_semantics = [#tpu.dimension_semantics<parallel>], iteration_bounds = array<i64: 2>, scalar_prefetch = 0 : i64, scratch_operands = 0 : i64, tpu.core_type = #tpu.core_type<tc>, window_params = [{transform_indices = @transform_0, window_bounds = array<i64: 1>}, {transform_indices = @transform_1, window_bounds = array<i64: 8, 256>}, {pipeline_mode = #tpu.pipeline_mode<synchronous>, transform_indices = @transform_2, window_bounds = array<i64: 256, 128>}, {pipeline_mode = #tpu.pipeline_mode<synchronous>, transform_indices = @transform_3, window_bounds = array<i64: 128, 128>}, {pipeline_mode = #tpu.pipeline_mode<synchronous>, transform_indices = @transform_4, window_bounds = array<i64: 128, 128>}, {transform_indices = @transform_5, window_bounds = array<i64: 1>}, {transform_indices = @transform_6, window_bounds = array<i64: 8, 128>}]} {
    %c0 = arith.constant 0 : index
    %c0_0 = arith.constant 0 : index
    %0 = vector.load %arg2[%c0, %c0_0] : memref<8x256xbf16, #tpu.memory_space<vmem>>, vector<8x256xbf16>
    %c0_1 = arith.constant 0 : index
    %c0_2 = arith.constant 0 : index
    %1 = vector.load %arg3[%c0_1, %c0_2] : memref<256x128xbf16, #tpu.memory_space<vmem>>, vector<256x128xbf16>
    %c0_3 = arith.constant 0 : index
    %c0_4 = arith.constant 0 : index
    %2 = vector.load %arg4[%c0_3, %c0_4] : memref<128x128xbf16, #tpu.memory_space<vmem>>, vector<128x128xbf16>
    %cst = arith.constant dense<0.000000e+00> : vector<8x128xf32>
    %3 = tpu.matmul %0, %1, %cst {dimension_numbers = #tpu.dot_dimension_numbers<[1], [0], [0], [1], [0, 0, 1, 1], [], []>} : vector<8x256xbf16>, vector<256x128xbf16>, vector<8x128xf32> -> vector<8x128xf32>
    %4 = arith.mulf %3, %3 : vector<8x128xf32>
    %cst_5 = arith.constant dense<0.000000e+00> : vector<8xf32>
    %5 = vector.multi_reduction <add>, %4, %cst_5 [1] : vector<8x128xf32> to vector<8xf32>
    %6 = vector.shape_cast %5 : vector<8xf32> to vector<8x1xf32>
    %cst_6 = arith.constant 9.99999996E-13 : f32
    %7 = vector.broadcast %cst_6 : f32 to vector<8x1xf32>
    %8 = arith.addf %6, %7 : vector<8x1xf32>
    %9 = math.rsqrt %8 : vector<8x1xf32>
    %10 = vector.broadcast %9 : vector<8x1xf32> to vector<8x128xf32>
    %11 = arith.mulf %3, %10 : vector<8x128xf32>
    %12 = arith.truncf %11 : vector<8x128xf32> to vector<8x128xbf16>
    %cst_7 = arith.constant dense<0.000000e+00> : vector<8x128xf32>
    %13 = tpu.matmul %12, %2, %cst_7 {dimension_numbers = #tpu.dot_dimension_numbers<[1], [0], [0], [1], [0, 0, 1, 1], [], []>} : vector<8x128xbf16>, vector<128x128xbf16>, vector<8x128xf32> -> vector<8x128xf32>
    %c0_8 = arith.constant 0 : index
    %14 = memref.load %arg1[%c0_8] : memref<1xi32, #tpu.memory_space<smem>>
    %15 = tpu.iota {dimensions = array<i32: 1>} : vector<8x128xi32>
    %16 = vector.broadcast %14 : i32 to vector<8x128xi32>
    %17 = arith.cmpi slt, %15, %16 : vector<8x128xi32>
    %cst_9 = arith.constant -1.000000e+30 : f32
    %18 = vector.broadcast %cst_9 : f32 to vector<8x128xf32>
    %19 = arith.select %17, %13, %18 : vector<8x128xi1>, vector<8x128xf32>
    %cst_10 = arith.constant dense<0xFF800000> : vector<8xf32>
    %20 = vector.multi_reduction <maximumf>, %19, %cst_10 [1] : vector<8x128xf32> to vector<8xf32>
    %21 = vector.shape_cast %20 : vector<8xf32> to vector<8x1xf32>
    %22 = vector.broadcast %21 : vector<8x1xf32> to vector<8x128xf32>
    %23 = arith.subf %19, %22 : vector<8x128xf32>
    %24 = math.exp %23 : vector<8x128xf32>
    %cst_11 = arith.constant dense<0.000000e+00> : vector<8xf32>
    %25 = vector.multi_reduction <add>, %24, %cst_11 [1] : vector<8x128xf32> to vector<8xf32>
    %26 = vector.shape_cast %25 : vector<8xf32> to vector<8x1xf32>
    %27 = vector.broadcast %26 : vector<8x1xf32> to vector<8x128xf32>
    %28 = arith.divf %24, %27 : vector<8x128xf32>
    %29 = arith.truncf %28 : vector<8x128xf32> to vector<8x128xbf16>
    %c0_12 = arith.constant 0 : index
    %c0_13 = arith.constant 0 : index
    %30 = vector.load %arg5[%c0_12, %c0_13] : memref<128x128xbf16, #tpu.memory_space<vmem>>, vector<128x128xbf16>
    %cst_14 = arith.constant dense<0.000000e+00> : vector<8x128xf32>
    %31 = tpu.matmul %29, %30, %cst_14 {dimension_numbers = #tpu.dot_dimension_numbers<[1], [0], [0], [1], [0, 0, 1, 1], [], []>} : vector<8x128xbf16>, vector<128x128xbf16>, vector<8x128xf32> -> vector<8x128xf32>
    %32 = arith.addf %3, %31 : vector<8x128xf32>
    %33 = arith.mulf %32, %32 : vector<8x128xf32>
    %cst_15 = arith.constant dense<0.000000e+00> : vector<8xf32>
    %34 = vector.multi_reduction <add>, %33, %cst_15 [1] : vector<8x128xf32> to vector<8xf32>
    %35 = vector.shape_cast %34 : vector<8xf32> to vector<8x1xf32>
    %cst_16 = arith.constant 9.99999996E-13 : f32
    %36 = vector.broadcast %cst_16 : f32 to vector<8x1xf32>
    %37 = arith.addf %35, %36 : vector<8x1xf32>
    %38 = math.rsqrt %37 : vector<8x1xf32>
    %39 = vector.broadcast %38 : vector<8x1xf32> to vector<8x128xf32>
    %40 = arith.mulf %32, %39 : vector<8x128xf32>
    %c0_17 = arith.constant 0 : index
    %41 = memref.load %arg6[%c0_17] : memref<1xf32, #tpu.memory_space<smem>>
    %42 = arith.truncf %40 : vector<8x128xf32> to vector<8x128xbf16>
    %cst_18 = arith.constant dense<0.000000e+00> : vector<8x128xf32>
    %43 = tpu.matmul %42, %2, %cst_18 {dimension_numbers = #tpu.dot_dimension_numbers<[1], [0], [0], [1], [0, 0, 1, 1], [], []>} : vector<8x128xbf16>, vector<128x128xbf16>, vector<8x128xf32> -> vector<8x128xf32>
    %44 = vector.broadcast %41 : f32 to vector<8x128xf32>
    %45 = arith.mulf %44, %43 : vector<8x128xf32>
    %c0_19 = arith.constant 0 : index
    %c0_20 = arith.constant 0 : index
    %46 = vector.load %arg7[%c0_19, %c0_20] : memref<8x128xf32, #tpu.memory_space<vmem>>, vector<8x128xf32>
    tpu.vector_store %arg7[%c0_19, %c0_20], %45 {strides = array<i32>} : memref<8x128xf32, #tpu.memory_space<vmem>>, vector<8x128xf32>,
    return
  }
  func.func @transform_0(%arg0: i32) -> i32 {
    %c0_i32 = arith.constant 0 : i32
    %c0_i32_0 = arith.constant 0 : i32
    return %c0_i32 : i32
  }
  func.func @transform_1(%arg0: i32) -> (i32, i32) {
    %c0_i32 = arith.constant 0 : i32
    %c0_i32_0 = arith.constant 0 : i32
    return %arg0, %c0_i32 : i32, i32
  }
  func.func @transform_2(%arg0: i32) -> (i32, i32) {
    %c0_i32 = arith.constant 0 : i32
    %c0_i32_0 = arith.constant 0 : i32
    %c0_i32_1 = arith.constant 0 : i32
    return %c0_i32, %c0_i32_0 : i32, i32
  }
  func.func @transform_3(%arg0: i32) -> (i32, i32) {
    %c0_i32 = arith.constant 0 : i32
    %c0_i32_0 = arith.constant 0 : i32
    %c0_i32_1 = arith.constant 0 : i32
    return %c0_i32, %c0_i32_0 : i32, i32
  }
  func.func @transform_4(%arg0: i32) -> (i32, i32) {
    %c0_i32 = arith.constant 0 : i32
    %c0_i32_0 = arith.constant 0 : i32
    %c0_i32_1 = arith.constant 0 : i32
    return %c0_i32, %c0_i32_0 : i32, i32
  }
  func.func @transform_5(%arg0: i32) -> i32 {
    %c0_i32 = arith.constant 0 : i32
    %c0_i32_0 = arith.constant 0 : i32
    return %c0_i32 : i32
  }
  func.func @transform_6(%arg0: i32) -> (i32, i32) {
    %c0_i32 = arith.constant 0 : i32
    %c0_i32_0 = arith.constant 0 : i32
    return %arg0, %c0_i32 : i32, i32
  }
}

</mosaic_0001>

<llo_original>
// kernel: tpu_custom_call.1
$region0: #{tpu_custom_call.1}
  #allocation0 [shape = 'u32[]', space=smem, size = 0x4, offset = 0x4, fixed_abs, tag = 'smem constant byte address 0x4 - core index']
  #allocation1 [shape = 'u32[144,128]{1,0:T(1,128)}', space=vmem, size = 0x12000, scoped, tag = 'internal scratch']
  #allocation2 [shape = 's32[1]{0:T(128)S(6)}', space=smem, size = 0x200, scoped, tag = 'scoped memory for tpu_custom_call.1']
  #allocation3 [shape = 'f32[1]{0:T(128)S(6)}', space=smem, size = 0x200, scoped, tag = 'scoped memory for tpu_custom_call.1']
  %s0 = inlined_call_operand.<no memory space> [shape: s32[1], index: 0, kind: input, shape index: {}]
  %s1 = inlined_call_operand.hbm [shape: bf16[16,256], index: 1, kind: input, shape index: {}]
  %s2 = inlined_call_operand.hbm [shape: bf16[256,128], index: 2, kind: input, shape index: {}]
  %s3 = inlined_call_operand.hbm [shape: bf16[128,128], index: 3, kind: input, shape index: {}]
  %s4 = inlined_call_operand.hbm [shape: bf16[128,128], index: 4, kind: input, shape index: {}]
  %s5 = inlined_call_operand.<no memory space> [shape: f32[1], index: 5, kind: input, shape index: {}]
  %s6 = inlined_call_operand.hbm [shape: f32[16,128], index: 6, kind: output, shape index: {}]
  %s7 = sld [smem:[#allocation0]]
  $region73: #{tpu_custom_call.1} parent=0
    _
  %s9 = ssub.s32 1, %s7
  %s10 = scalar_select 0, %s9, %s7
  %11 = sst [smem:[#allocation2]] %s0
  %12 = sst [smem:[#allocation3]] %s5
  $region1: #{tpu_custom_call.1} parent=0
    #allocation4 [shape = 'u8[8192]{0}', space=vmem, size = 0x2000, scoped, tag = 'input window, operand 1']
    #allocation5 [shape = 's32[2]{0}', space=sflag, size = 0x8, scoped, tag = 'scoped memory for tpu_custom_call.1']
    #allocation6 [shape = 's32[2]{0}', space=sflag, size = 0x8, scoped, tag = 'scoped memory for tpu_custom_call.1']
    #allocation7 [shape = 'u8[65536]{0}', space=vmem, size = 0x10000, scoped, tag = 'input window, operand 2, single buffered']
    #allocation8 [shape = 's32[1]{0}', space=sflag, size = 0x4, scoped, tag = 'scoped memory for tpu_custom_call.1']
    #allocation9 [shape = 'u8[32768]{0}', space=vmem, size = 0x8000, scoped, tag = 'input window, operand 3, single buffered']
    #allocation10 [shape = 'u8[32768]{0}', space=vmem, size = 0x8000, scoped, tag = 'input window, operand 4, single buffered']
    #allocation11 [shape = 's32[1]{0}', space=sflag, size = 0x4, scoped, tag = 'scoped memory for tpu_custom_call.1']
    #allocation12 [shape = 'u8[8192]{0}', space=vmem, size = 0x2000, scoped, tag = 'output window, operand 0']
    %13 = vsyncpa [#allocation5], 0
    %s14 = scalar_lea.sflag [#allocation5], 1
    %15 = vsyncpa %s14, 0
    %16 = vsyncpa [#allocation8], 0
    %17 = vsyncpa [#allocation11], 0
    %18 = vsyncpa [#allocation6], 0
    %s19 = scalar_lea.sflag [#allocation6], 1
    %20 = vsyncpa %s19, 0
    loop: start=0, step=1, limit=4
    $region2: #{tpu_custom_call.1} parent=1 // loop_pre_header
      _
    $region3: #{tpu_custom_call.1} parent=1 // loop_header
      %s22 = sphi 0, %s26
      %p23 = scmp.ge.s32.totalorder %s22, 4
      %s30 = sphi 0, %s30
      %s32 = sphi 0, %s30
      %s33 = sphi 0, %s32
      %s47 = sphi 0, %s33
      %s53 = sphi 0, %s55
      %s56 = sphi 0, %s53
      %s57 = sphi 0, %s56
      %s73 = sphi 0, %s57
      %s77 = sphi 0, %s77
      %s79 = sphi 0, %s77
      %s80 = sphi 0, %s79
      %s94 = sphi 0, %s80
      %s98 = sphi 0, %s98
      %s100 = sphi 0, %s98
      %s101 = sphi 0, %s100
      %s115 = sphi 0, %s101
      %s119 = sphi 0, %s119
      %s121 = sphi 0, %s119
      %s122 = sphi 0, %s121
      %s136 = sphi 0, %s122
      %s140 = sphi 0, %s140
      %s142 = sphi 0, %s140
      %s143 = sphi 0, %s142
      %s157 = sphi 0, %s143
      %s163 = sphi 0, %s165
      %s166 = sphi 0, %s163
      %s167 = sphi 0, %s166
      %s183 = sphi 0, %s167
    $region4: #{tpu_custom_call.1} parent=1 // loop_header_branch
      %25 = sbr.rel (%p23) target = $region8
    $region5: #{tpu_custom_call.1} parent=1 // loop_body
      %s27 = ssub.s32 %s22, 1
      %s28 = ssub.s32 %s22, 2
      %s29 = sadd.s32 %s22, 1
      %s31 = sadd.s32 %s30, 1
      %p34 = scmp.eq.s32.totalorder %s22, 1
      %p35 = scmp.ne.s32.totalorder %s30, %s32
      %p36 = scmp.eq.s32.totalorder %s22, 0
      %p37 = por %p35, %p36
      %p38 = scmp.ne.s32.totalorder %s30, %s32
      %p39 = scmp.eq.s32.totalorder %s27, 1
      %p40 = por %p38, %p39
      %p41 = scmp.ne.s32.totalorder %s32, %s33
      %p42 = scmp.eq.s32.totalorder %s27, 0
      %p43 = por %p41, %p42
      %p44 = scmp.ne.s32.totalorder %s32, %s33
      %p45 = scmp.eq.s32.totalorder %s28, 1
      %p46 = por %p44, %p45
      %p48 = scmp.ne.s32.totalorder %s33, %s47
      %p49 = scmp.eq.s32.totalorder %s28, 0
      %p50 = por %p48, %p49
      %s51 = ssub.s32 %s22, %s29
      %p52 = scmp.eq.s32.totalorder %s51, 0
      %s54 = sadd.s32 %s53, 1
      %s55 = scalar_select %p52, %s53, %s54
      %p58 = pneg %p52
      %p59 = scmp.eq.s32.totalorder %s22, 1
      %p60 = por %p58, %p59
      %p61 = scmp.ne.s32.totalorder %s53, %s56
      %p62 = scmp.eq.s32.totalorder %s22, 0
      %p63 = por %p61, %p62
      %p64 = scmp.ne.s32.totalorder %s53, %s56
      %p65 = scmp.eq.s32.totalorder %s27, 1
      %p66 = por %p64, %p65
      %p67 = scmp.ne.s32.totalorder %s56, %s57
      %p68 = scmp.eq.s32.totalorder %s27, 0
      %p69 = por %p67, %p68
      %p70 = scmp.ne.s32.totalorder %s56, %s57
      %p71 = scmp.eq.s32.totalorder %s28, 1
      %p72 = por %p70, %p71
      %p74 = scmp.ne.s32.totalorder %s57, %s73
      %p75 = scmp.eq.s32.totalorder %s28, 0
      %p76 = por %p74, %p75
      %s78 = sadd.s32 %s77, 1
      %p81 = scmp.eq.s32.totalorder %s22, 1
      %p82 = scmp.ne.s32.totalorder %s77, %s79
      %p83 = scmp.eq.s32.totalorder %s22, 0
      %p84 = por %p82, %p83
      %p85 = scmp.ne.s32.totalorder %s77, %s79
      %p86 = scmp.eq.s32.totalorder %s27, 1
      %p87 = por %p85, %p86
      %p88 = scmp.ne.s32.totalorder %s79, %s80
      %p89 = scmp.eq.s32.totalorder %s27, 0
      %p90 = por %p88, %p89
      %p91 = scmp.ne.s32.totalorder %s79, %s80
      %p92 = scmp.eq.s32.totalorder %s28, 1
      %p93 = por %p91, %p92
      %p95 = scmp.ne.s32.totalorder %s80, %s94
      %p96 = scmp.eq.s32.totalorder %s28, 0
      %p97 = por %p95, %p96
      %s99 = sadd.s32 %s98, 1
      %p102 = scmp.eq.s32.totalorder %s22, 1
      %p103 = scmp.ne.s32.totalorder %s98, %s100
      %p104 = scmp.eq.s32.totalorder %s22, 0
      %p105 = por %p103, %p104
      %p106 = scmp.ne.s32.totalorder %s98, %s100
      %p107 = scmp.eq.s32.totalorder %s27, 1
      %p108 = por %p106, %p107
      %p109 = scmp.ne.s32.totalorder %s100, %s101
      %p110 = scmp.eq.s32.totalorder %s27, 0
      %p111 = por %p109, %p110
      %p112 = scmp.ne.s32.totalorder %s100, %s101
      %p113 = scmp.eq.s32.totalorder %s28, 1
      %p114 = por %p112, %p113
      %p116 = scmp.ne.s32.totalorder %s101, %s115
      %p117 = scmp.eq.s32.totalorder %s28, 0
      %p118 = por %p116, %p117
      %s120 = sadd.s32 %s119, 1
      %p123 = scmp.eq.s32.totalorder %s22, 1
      %p124 = scmp.ne.s32.totalorder %s119, %s121
      %p125 = scmp.eq.s32.totalorder %s22, 0
      %p126 = por %p124, %p125
      %p127 = scmp.ne.s32.totalorder %s119, %s121
      %p128 = scmp.eq.s32.totalorder %s27, 1
      %p129 = por %p127, %p128
      %p130 = scmp.ne.s32.totalorder %s121, %s122
      %p131 = scmp.eq.s32.totalorder %s27, 0
      %p132 = por %p130, %p131
      %p133 = scmp.ne.s32.totalorder %s121, %s122
      %p134 = scmp.eq.s32.totalorder %s28, 1
      %p135 = por %p133, %p134
      %p137 = scmp.ne.s32.totalorder %s122, %s136
      %p138 = scmp.eq.s32.totalorder %s28, 0
      %p139 = por %p137, %p138
      %s141 = sadd.s32 %s140, 1
      %p144 = scmp.eq.s32.totalorder %s22, 1
      %p145 = scmp.ne.s32.totalorder %s140, %s142
      %p146 = scmp.eq.s32.totalorder %s22, 0
      %p147 = por %p145, %p146
      %p148 = scmp.ne.s32.totalorder %s140, %s142
      %p149 = scmp.eq.s32.totalorder %s27, 1
      %p150 = por %p148, %p149
      %p151 = scmp.ne.s32.totalorder %s142, %s143
      %p152 = scmp.eq.s32.totalorder %s27, 0
      %p153 = por %p151, %p152
      %p154 = scmp.ne.s32.totalorder %s142, %s143
      %p155 = scmp.eq.s32.totalorder %s28, 1
      %p156 = por %p154, %p155
      %p158 = scmp.ne.s32.totalorder %s143, %s157
      %p159 = scmp.eq.s32.totalorder %s28, 0
      %p160 = por %p158, %p159
      %s161 = ssub.s32 %s22, %s29
      %p162 = scmp.eq.s32.totalorder %s161, 0
      %s164 = sadd.s32 %s163, 1
      %s165 = scalar_select %p162, %s163, %s164
      %p168 = pneg %p162
      %p169 = scmp.eq.s32.totalorder %s22, 1
      %p170 = por %p168, %p169
      %p171 = scmp.ne.s32.totalorder %s163, %s166
      %p172 = scmp.eq.s32.totalorder %s22, 0
      %p173 = por %p171, %p172
      %p174 = scmp.ne.s32.totalorder %s163, %s166
      %p175 = scmp.eq.s32.totalorder %s27, 1
      %p176 = por %p174, %p175
      %p177 = scmp.ne.s32.totalorder %s166, %s167
      %p178 = scmp.eq.s32.totalorder %s27, 0
      %p179 = por %p177, %p178
      %p180 = scmp.ne.s32.totalorder %s166, %s167
      %p181 = scmp.eq.s32.totalorder %s28, 1
      %p182 = por %p180, %p181
      %p184 = scmp.ne.s32.totalorder %s167, %s183
      %p185 = scmp.eq.s32.totalorder %s28, 0
      %p186 = por %p184, %p185
      %p187 = scmp.le.s32.totalorder 1, %s22
      %p188 = scmp.lt.s32.totalorder %s22, 3
      %p189 = pnand %p187, %p188
      %p190 = pneg %p189
      // Predicated region
      $region9: #{tpu_custom_call.1} parent=5 // pred_check
        _
      $region10: #{tpu_custom_call.1} parent=5 // pred_check_branch
        %192 = sbr.rel (%p189) target = $region12
      $region11: #{tpu_custom_call.1} parent=5 // pred_region
        %s193 = ssub.s32 %s22, 1
        // Predicated region
        $region13: #{tpu_custom_call.1} parent=11 // pred_check
          %p194 = pneg %p43
        $region14: #{tpu_custom_call.1} parent=11 // pred_check_branch
          %196 = sbr.rel (%p194) target = $region16
        $region15: #{tpu_custom_call.1} parent=11 // pred_region
          _
        $region16: #{tpu_custom_call.1} parent=11 // pred_fallthru
          _
        // Predicated region
        $region17: #{tpu_custom_call.1} parent=11 // pred_check
          %p197 = pneg %p90
        $region18: #{tpu_custom_call.1} parent=11 // pred_check_branch
          %199 = sbr.rel (%p197) target = $region20
        $region19: #{tpu_custom_call.1} parent=11 // pred_region
          %s201 = ssub.s32 2048, 2048
          %202 = vsyncadd [#allocation8], %s201
          %s203 = sshll.u32 [#allocation7], 4
          %s204 = int_to_ptr.vmem [resolvable:$true] %s203
          %209 = dma.hbm_to_vmem [thread:$0]  %s2, 2048, %s204, [#allocation8], 64, 64, 4
        $region20: #{tpu_custom_call.1} parent=11 // pred_fallthru
          _
        // Predicated region
        $region21: #{tpu_custom_call.1} parent=11 // pred_check
          %p210 = pneg %p111
        $region22: #{tpu_custom_call.1} parent=11 // pred_check_branch
          %212 = sbr.rel (%p210) target = $region24
        $region23: #{tpu_custom_call.1} parent=11 // pred_region
          %s214 = ssub.s32 1024, 1024
          %215 = vsyncadd [#allocation8], %s214
          %s216 = sshll.u32 [#allocation9], 4
          %s217 = int_to_ptr.vmem [resolvable:$true] %s216
          %222 = dma.hbm_to_vmem [thread:$0]  %s3, 1024, %s217, [#allocation8], 64, 64, 4
        $region24: #{tpu_custom_call.1} parent=11 // pred_fallthru
          _
        // Predicated region
        $region25: #{tpu_custom_call.1} parent=11 // pred_check
          %p223 = pneg %p132
        $region26: #{tpu_custom_call.1} parent=11 // pred_check_branch
          %225 = sbr.rel (%p223) target = $region28
        $region27: #{tpu_custom_call.1} parent=11 // pred_region
          %s227 = ssub.s32 1024, 1024
          %228 = vsyncadd [#allocation11], %s227
          %s229 = sshll.u32 [#allocation10], 4
          %s230 = int_to_ptr.vmem [resolvable:$true] %s229
          %235 = dma.hbm_to_vmem [thread:$0]  %s4, 1024, %s230, [#allocation11], 64, 64, 4
        $region28: #{tpu_custom_call.1} parent=11 // pred_fallthru
          _
        // Predicated region
        $region29: #{tpu_custom_call.1} parent=11 // pred_check
          %p236 = pneg %p153
        $region30: #{tpu_custom_call.1} parent=11 // pred_check_branch
          %238 = sbr.rel (%p236) target = $region32
        $region31: #{tpu_custom_call.1} parent=11 // pred_region
          _
        $region32: #{tpu_custom_call.1} parent=11 // pred_fallthru
          _
      $region12: #{tpu_custom_call.1} parent=5 // pred_fallthru
        _
      %p239 = scmp.lt.s32.totalorder %s22, 2
      // Predicated region
      $region33: #{tpu_custom_call.1} parent=5 // pred_check
        %p240 = pneg %p239
      $region34: #{tpu_custom_call.1} parent=5 // pred_check_branch
        %242 = sbr.rel (%p240) target = $region36
      $region35: #{tpu_custom_call.1} parent=5 // pred_region
        // Predicated region
        $region37: #{tpu_custom_call.1} parent=35 // pred_check
          %p243 = pneg %p63
        $region38: #{tpu_custom_call.1} parent=35 // pred_check_branch
          %245 = sbr.rel (%p243) target = $region40
        $region39: #{tpu_custom_call.1} parent=35 // pred_region
          %s246 = sand.u32 %s53, 1
          %s247 = scalar_lea.sflag [#allocation5], %s246
          %s248 = sand.u32 %s53, 1
          %s249 = smul.addr %s248, 8
          %s250 = scalar_lea.vmem [#allocation4], %s249
          %s252 = ssub.s32 128, 128
          %253 = vsyncadd %s247, %s252
          %s254 = smul.addr %s22, 2
          %s255 = smul.addr %s254, 64
          %s256 = scalar_lea.hbm %s1, %s255
          %s258 = sshll.u32 %s250, 4
          %s259 = int_to_ptr.vmem [resolvable:$true] %s258
          %261 = dma.hbm_to_vmem [thread:$0]  %s256, 128, %s259, %s247
        $region40: #{tpu_custom_call.1} parent=35 // pred_fallthru
          _
      $region36: #{tpu_custom_call.1} parent=5 // pred_fallthru
        _
      %p262 = scmp.le.s32.totalorder 1, %s22
      %p263 = scmp.lt.s32.totalorder %s22, 3
      %p264 = pnand %p262, %p263
      %p265 = pneg %p264
      // Predicated region
      $region41: #{tpu_custom_call.1} parent=5 // pred_check
        _
      $region42: #{tpu_custom_call.1} parent=5 // pred_check_branch
        %267 = sbr.rel (%p264) target = $region44
      $region43: #{tpu_custom_call.1} parent=5 // pred_region
        %s268 = ssub.s32 %s22, 1
        %s269 = sand.u32 %s56, 1
        %s270 = scalar_lea.sflag [#allocation5], %s269
        %s271 = sand.u32 %s56, 1
        %s272 = smul.addr %s271, 8
        %s273 = scalar_lea.vmem [#allocation4], %s272
        // Predicated region
        $region45: #{tpu_custom_call.1} parent=43 // pred_check
          %p274 = pneg %p69
        $region46: #{tpu_custom_call.1} parent=43 // pred_check_branch
          %276 = sbr.rel (%p274) target = $region48
        $region47: #{tpu_custom_call.1} parent=43 // pred_region
          %277 = dma.done %s270, 128
        $region48: #{tpu_custom_call.1} parent=43 // pred_fallthru
          _
        // Predicated region
        $region49: #{tpu_custom_call.1} parent=43 // pred_check
          %p278 = pneg %p90
        $region50: #{tpu_custom_call.1} parent=43 // pred_check_branch
          %280 = sbr.rel (%p278) target = $region52
        $region51: #{tpu_custom_call.1} parent=43 // pred_region
          %281 = dma.done [#allocation8], 2048
        $region52: #{tpu_custom_call.1} parent=43 // pred_fallthru
          _
        // Predicated region
        $region53: #{tpu_custom_call.1} parent=43 // pred_check
          %p282 = pneg %p111
        $region54: #{tpu_custom_call.1} parent=43 // pred_check_branch
          %284 = sbr.rel (%p282) target = $region56
        $region55: #{tpu_custom_call.1} parent=43 // pred_region
          %285 = dma.done [#allocation8], 1024
        $region56: #{tpu_custom_call.1} parent=43 // pred_fallthru
          _
        // Predicated region
        $region57: #{tpu_custom_call.1} parent=43 // pred_check
          %p286 = pneg %p132
        $region58: #{tpu_custom_call.1} parent=43 // pred_check_branch
          %288 = sbr.rel (%p286) target = $region60
        $region59: #{tpu_custom_call.1} parent=43 // pred_region
          %289 = dma.done [#allocation11], 1024
        $region60: #{tpu_custom_call.1} parent=43 // pred_fallthru
          _
        %p290 = pneg %p43
        %p291 = pneg %p40
        %s292 = sand.u32 %s56, 1
        %s293 = scalar_lea.sflag [#allocation5], %s292
        %s294 = sand.u32 %s56, 1
        %s295 = smul.addr %s294, 8
        %s296 = scalar_lea.vmem [#allocation4], %s295
        %p297 = pneg %p69
        %p298 = pneg %p66
        %p299 = pneg %p90
        %p300 = pneg %p87
        %p301 = pneg %p111
        %p302 = pneg %p108
        %p303 = pneg %p132
        %p304 = pneg %p129
        %p305 = pneg %p153
        %p306 = pneg %p150
        %p307 = pneg %p179
        %p308 = pneg %p176
        %s309 = sand.u32 %s166, 1
        %s310 = scalar_lea.sflag [#allocation6], %s309
        %s311 = sand.u32 %s166, 1
        %s312 = smul.addr %s311, 8
        %s313 = scalar_lea.vmem [#allocation12], %s312
        %v315 = vld [vmem:[%s273] sm:$0xff]
        %v316 = vld [vmem:[#allocation7] sm:$0xf]
        %v317 = vld [vmem:[#allocation7 + $0x4] sm:$0xf]
        %v318 = vld [vmem:[#allocation7 + $0x8] sm:$0xf]
        %v319 = vld [vmem:[#allocation7 + $0xc] sm:$0xf]
        %v320 = vld [vmem:[#allocation7 + $0x10] sm:$0xf]
        %v321 = vld [vmem:[#allocation7 + $0x14] sm:$0xf]
        %v322 = vld [vmem:[#allocation7 + $0x18] sm:$0xf]
        %v323 = vld [vmem:[#allocation7 + $0x1c] sm:$0xf]
        %v324 = vld [vmem:[#allocation7 + $0x20] sm:$0xf]
        %v325 = vld [vmem:[#allocation7 + $0x24] sm:$0xf]
        %v326 = vld [vmem:[#allocation7 + $0x28] sm:$0xf]
        %v327 = vld [vmem:[#allocation7 + $0x2c] sm:$0xf]
        %v328 = vld [vmem:[#allocation7 + $0x30] sm:$0xf]
        %v329 = vld [vmem:[#allocation7 + $0x34] sm:$0xf]
        %v330 = vld [vmem:[#allocation7 + $0x38] sm:$0xf]
        %v331 = vld [vmem:[#allocation7 + $0x3c] sm:$0xf]
        %v332 = vld [vmem:[#allocation7 + $0x40] sm:$0xf]
        %v333 = vld [vmem:[#allocation7 + $0x44] sm:$0xf]
        %v334 = vld [vmem:[#allocation7 + $0x48] sm:$0xf]
        %v335 = vld [vmem:[#allocation7 + $0x4c] sm:$0xf]
        %v336 = vld [vmem:[#allocation7 + $0x50] sm:$0xf]
        %v337 = vld [vmem:[#allocation7 + $0x54] sm:$0xf]
        %v338 = vld [vmem:[#allocation7 + $0x58] sm:$0xf]
        %v339 = vld [vmem:[#allocation7 + $0x5c] sm:$0xf]
        %v340 = vld [vmem:[#allocation7 + $0x60] sm:$0xf]
        %v341 = vld [vmem:[#allocation7 + $0x64] sm:$0xf]
        %v342 = vld [vmem:[#allocation7 + $0x68] sm:$0xf]
        %v343 = vld [vmem:[#allocation7 + $0x6c] sm:$0xf]
        %v344 = vld [vmem:[#allocation7 + $0x70] sm:$0xf]
        %v345 = vld [vmem:[#allocation7 + $0x74] sm:$0xf]
        %v346 = vld [vmem:[#allocation7 + $0x78] sm:$0xf]
        %v347 = vld [vmem:[#allocation7 + $0x7c] sm:$0xf]
        %v348 = vld [vmem:[#allocation9] sm:$0xf]
        %v349 = vld [vmem:[#allocation9 + $0x4] sm:$0xf]
        %v350 = vld [vmem:[#allocation9 + $0x8] sm:$0xf]
        %v351 = vld [vmem:[#allocation9 + $0xc] sm:$0xf]
        %v352 = vld [vmem:[#allocation9 + $0x10] sm:$0xf]
        %v353 = vld [vmem:[#allocation9 + $0x14] sm:$0xf]
        %v354 = vld [vmem:[#allocation9 + $0x18] sm:$0xf]
        %v355 = vld [vmem:[#allocation9 + $0x1c] sm:$0xf]
        %v356 = vld [vmem:[#allocation9 + $0x20] sm:$0xf]
        %v357 = vld [vmem:[#allocation9 + $0x24] sm:$0xf]
        %v358 = vld [vmem:[#allocation9 + $0x28] sm:$0xf]
        %v359 = vld [vmem:[#allocation9 + $0x2c] sm:$0xf]
        %v360 = vld [vmem:[#allocation9 + $0x30] sm:$0xf]
        %v361 = vld [vmem:[#allocation9 + $0x34] sm:$0xf]
        %v362 = vld [vmem:[#allocation9 + $0x38] sm:$0xf]
        %v363 = vld [vmem:[#allocation9 + $0x3c] sm:$0xf]
        %v365 = vunpack.c.l.b16 %v315
        %v366 = vunpack.c.h.b16 %v315
        %v367 = vpack.c.b16 %v365, %v365
        %v368 = vpack.c.b16 %v366, %v366
        %v403 = vunpack.c.l.b16 %v316
        %v404 = vunpack.c.l.b16 %v317
        %v405 = vunpack.c.l.b16 %v318
        %v406 = vunpack.c.l.b16 %v319
        %v407 = vunpack.c.l.b16 %v320
        %v408 = vunpack.c.l.b16 %v321
        %v409 = vunpack.c.l.b16 %v322
        %v410 = vunpack.c.l.b16 %v323
        %v411 = vunpack.c.l.b16 %v324
        %v412 = vunpack.c.l.b16 %v325
        %v413 = vunpack.c.l.b16 %v326
        %v414 = vunpack.c.l.b16 %v327
        %v415 = vunpack.c.l.b16 %v328
        %v416 = vunpack.c.l.b16 %v329
        %v417 = vunpack.c.l.b16 %v330
        %v418 = vunpack.c.l.b16 %v331
        %v419 = vunpack.c.l.b16 %v332
        %v420 = vunpack.c.l.b16 %v333
        %v421 = vunpack.c.l.b16 %v334
        %v422 = vunpack.c.l.b16 %v335
        %v423 = vunpack.c.l.b16 %v336
        %v424 = vunpack.c.l.b16 %v337
        %v425 = vunpack.c.l.b16 %v338
        %v426 = vunpack.c.l.b16 %v339
        %v427 = vunpack.c.l.b16 %v340
        %v428 = vunpack.c.l.b16 %v341
        %v429 = vunpack.c.l.b16 %v342
        %v430 = vunpack.c.l.b16 %v343
        %v431 = vunpack.c.l.b16 %v344
        %v432 = vunpack.c.l.b16 %v345
        %v433 = vunpack.c.l.b16 %v346
        %v434 = vunpack.c.l.b16 %v347
        %v435 = vpack.c.b16 %v404, %v403
        %v436 = vpack.c.b16 %v406, %v405
        %v437 = vpack.c.b16 %v408, %v407
        %v438 = vpack.c.b16 %v410, %v409
        %v439 = vpack.c.b16 %v412, %v411
        %v440 = vpack.c.b16 %v414, %v413
        %v441 = vpack.c.b16 %v416, %v415
        %v442 = vpack.c.b16 %v418, %v417
        %v443 = vpack.c.b16 %v420, %v419
        %v444 = vpack.c.b16 %v422, %v421
        %v445 = vpack.c.b16 %v424, %v423
        %v446 = vpack.c.b16 %v426, %v425
        %v447 = vpack.c.b16 %v428, %v427
        %v448 = vpack.c.b16 %v430, %v429
        %v449 = vpack.c.b16 %v432, %v431
        %v450 = vpack.c.b16 %v434, %v433
        %467 = vmatprep.subr.bf16.mxu0 0
        %468 = vmatpush1.bf16.msra.mxu0 %v442
        %469 = vmatprep.subr.bf16.mxu0 0
        %470 = vmatpush1.bf16.msra.mxu0 %v441
        %471 = vmatprep.subr.bf16.mxu0 0
        %472 = vmatpush1.bf16.msra.mxu0 %v440
        %473 = vmatprep.subr.bf16.mxu0 0
        %474 = vmatpush1.bf16.msra.mxu0 %v439
        %475 = vmatprep.subr.bf16.mxu0 0
        %476 = vmatpush1.bf16.msra.mxu0 %v438
        %477 = vmatprep.subr.bf16.mxu0 0
        %478 = vmatpush1.bf16.msra.mxu0 %v437
        %479 = vmatprep.subr.bf16.mxu0 0
        %480 = vmatpush1.bf16.msra.mxu0 %v436
        %481 = vmatprep.subr.bf16.mxu0 0
        %482 = vmatpush1.bf16.msra.mxu0 %v435
        %483 = vmatprep.subr.bf16.mxu0 0
        %484 = vmatpush2.bf16.msra.mxu0 %v450
        %485 = vmatprep.subr.bf16.mxu0 0
        %486 = vmatpush2.bf16.msra.mxu0 %v449
        %487 = vmatprep.subr.bf16.mxu0 0
        %488 = vmatpush2.bf16.msra.mxu0 %v448
        %489 = vmatprep.subr.bf16.mxu0 0
        %490 = vmatpush2.bf16.msra.mxu0 %v447
        %491 = vmatprep.subr.bf16.mxu0 0
        %492 = vmatpush2.bf16.msra.mxu0 %v446
        %493 = vmatprep.subr.bf16.mxu0 0
        %494 = vmatpush2.bf16.msra.mxu0 %v445
        %495 = vmatprep.subr.bf16.mxu0 0
        %496 = vmatpush2.bf16.msra.mxu0 %v444
        %497 = vmatprep.subr.bf16.mxu0 0
        %498 = vmatpush2.bf16.msra.mxu0 %v443
        %499 = vmatprep.mubr.bf16.mxu0 %v368
        %500 = vmatmul.mubr.bf16.gmra.mxu0 %v367
        %v501 = vpop.f32.mrf.mxu0
        %v502 = vadd.f32 0.0, %v501
        %v503 = vpop.f32.mrf.mxu0
        %v504 = vpop.f32.mrf.mxu0
        %v505 = vpop.f32.mrf.mxu0
        %506 = vdwg.mxu0
        %v507 = vmul.f32 %v502, %v502
        %508 = vadd.xlane.f32.xlu0 %v507
        %v509 = vpop.xlane.xlu0 %508
        %v510 = vadd.f32 %v509, 1e-12
        %v511 = vrsqrt.pop %v510
        %v512 = vmul.f32 %v502, %v511
        %v513 = vpack.c.bf16 %v512, %v512
        %v530 = vunpack.c.l.b16 %v348
        %v531 = vunpack.c.l.b16 %v349
        %v532 = vunpack.c.l.b16 %v350
        %v533 = vunpack.c.l.b16 %v351
        %v534 = vunpack.c.l.b16 %v352
        %v535 = vunpack.c.l.b16 %v353
        %v536 = vunpack.c.l.b16 %v354
        %v537 = vunpack.c.l.b16 %v355
        %v538 = vunpack.c.l.b16 %v356
        %v539 = vunpack.c.l.b16 %v357
        %v540 = vunpack.c.l.b16 %v358
        %v541 = vunpack.c.l.b16 %v359
        %v542 = vunpack.c.l.b16 %v360
        %v543 = vunpack.c.l.b16 %v361
        %v544 = vunpack.c.l.b16 %v362
        %v545 = vunpack.c.l.b16 %v363
        %v546 = vpack.c.b16 %v531, %v530
        %v547 = vpack.c.b16 %v533, %v532
        %v548 = vpack.c.b16 %v535, %v534
        %v549 = vpack.c.b16 %v537, %v536
        %v550 = vpack.c.b16 %v539, %v538
        %v551 = vpack.c.b16 %v541, %v540
        %v552 = vpack.c.b16 %v543, %v542
        %v553 = vpack.c.b16 %v545, %v544
        %562 = vmatprep.subr.bf16.mxu0 0
        %563 = vmatpush1.bf16.msra.mxu0 %v553
        %564 = vmatprep.subr.bf16.mxu0 0
        %565 = vmatpush1.bf16.msra.mxu0 %v552
        %566 = vmatprep.subr.bf16.mxu0 0
        %567 = vmatpush1.bf16.msra.mxu0 %v551
        %568 = vmatprep.subr.bf16.mxu0 0
        %569 = vmatpush1.bf16.msra.mxu0 %v550
        %570 = vmatprep.subr.bf16.mxu0 0
        %571 = vmatpush1.bf16.msra.mxu0 %v549
        %572 = vmatprep.subr.bf16.mxu0 0
        %573 = vmatpush1.bf16.msra.mxu0 %v548
        %574 = vmatprep.subr.bf16.mxu0 0
        %575 = vmatpush1.bf16.msra.mxu0 %v547
        %576 = vmatprep.subr.bf16.mxu0 0
        %577 = vmatpush1.bf16.msra.mxu0 %v546
        %578 = vmatprep.subr.bf16.mxu0 0
        %579 = vmatpush2.bf16.msra.mxu0 0
        %580 = vmatprep.subr.bf16.mxu0 0
        %581 = vmatpush2.bf16.msra.mxu0 0
        %582 = vmatprep.subr.bf16.mxu0 0
        %583 = vmatpush2.bf16.msra.mxu0 0
        %584 = vmatprep.subr.bf16.mxu0 0
        %585 = vmatpush2.bf16.msra.mxu0 0
        %586 = vmatprep.subr.bf16.mxu0 0
        %587 = vmatpush2.bf16.msra.mxu0 0
        %588 = vmatprep.subr.bf16.mxu0 0
        %589 = vmatpush2.bf16.msra.mxu0 0
        %590 = vmatprep.subr.bf16.mxu0 0
        %591 = vmatpush2.bf16.msra.mxu0 0
        %592 = vmatprep.subr.bf16.mxu0 0
        %593 = vmatpush2.bf16.msra.mxu0 0
        %594 = vmatprep.mubr.bf16.mxu0 0
        %595 = vmatmul.mubr.bf16.gmra.mxu0 %v513
        %v596 = vpop.f32.mrf.mxu0
        %v597 = vadd.f32 0.0, %v596
        %v598 = vpop.f32.mrf.mxu0
        %v599 = vpop.f32.mrf.mxu0
        %v600 = vpop.f32.mrf.mxu0
        %601 = vdwg.mxu0
        %s602 = sld [smem:[#allocation2]]
        %v603 = vlaneseq
        %v604 = vand.u32 %v603, 127
        %v605 = vstv %s602
        %vm606 = vcmp.lt.s32.totalorder %v604, %v605
        %v607 = vsel %vm606, %v597, -1e+30
        %608 = vmax.xlane.f32.xlu0 %v607
        %v609 = vpop.xlane.xlu0 %608
        %v610 = vsub.f32 %v607, %v609
        %v611 = vmul.f32 %v610, 1.442695
        %v612 = vpow.pop %v611
        %613 = vadd.xlane.f32.xlu0 %v612
        %v614 = vpop.xlane.xlu0 %613
        %v615 = vrcp.pop %v614
        %v616 = vmul.f32 %v612, %v615
        %v617 = vpack.c.bf16 %v616, %v616
        %v618 = vld [vmem:[#allocation10] sm:$0xf]
        %v619 = vld [vmem:[#allocation10 + $0x4] sm:$0xf]
        %v620 = vld [vmem:[#allocation10 + $0x8] sm:$0xf]
        %v621 = vld [vmem:[#allocation10 + $0xc] sm:$0xf]
        %v622 = vld [vmem:[#allocation10 + $0x10] sm:$0xf]
        %v623 = vld [vmem:[#allocation10 + $0x14] sm:$0xf]
        %v624 = vld [vmem:[#allocation10 + $0x18] sm:$0xf]
        %v625 = vld [vmem:[#allocation10 + $0x1c] sm:$0xf]
        %v626 = vld [vmem:[#allocation10 + $0x20] sm:$0xf]
        %v627 = vld [vmem:[#allocation10 + $0x24] sm:$0xf]
        %v628 = vld [vmem:[#allocation10 + $0x28] sm:$0xf]
        %v629 = vld [vmem:[#allocation10 + $0x2c] sm:$0xf]
        %v630 = vld [vmem:[#allocation10 + $0x30] sm:$0xf]
        %v631 = vld [vmem:[#allocation10 + $0x34] sm:$0xf]
        %v632 = vld [vmem:[#allocation10 + $0x38] sm:$0xf]
        %v633 = vld [vmem:[#allocation10 + $0x3c] sm:$0xf]
        %v650 = vunpack.c.l.b16 %v618
        %v651 = vunpack.c.l.b16 %v619
        %v652 = vunpack.c.l.b16 %v620
        %v653 = vunpack.c.l.b16 %v621
        %v654 = vunpack.c.l.b16 %v622
        %v655 = vunpack.c.l.b16 %v623
        %v656 = vunpack.c.l.b16 %v624
        %v657 = vunpack.c.l.b16 %v625
        %v658 = vunpack.c.l.b16 %v626
        %v659 = vunpack.c.l.b16 %v627
        %v660 = vunpack.c.l.b16 %v628
        %v661 = vunpack.c.l.b16 %v629
        %v662 = vunpack.c.l.b16 %v630
        %v663 = vunpack.c.l.b16 %v631
        %v664 = vunpack.c.l.b16 %v632
        %v665 = vunpack.c.l.b16 %v633
        %v666 = vpack.c.b16 %v651, %v650
        %v667 = vpack.c.b16 %v653, %v652
        %v668 = vpack.c.b16 %v655, %v654
        %v669 = vpack.c.b16 %v657, %v656
        %v670 = vpack.c.b16 %v659, %v658
        %v671 = vpack.c.b16 %v661, %v660
        %v672 = vpack.c.b16 %v663, %v662
        %v673 = vpack.c.b16 %v665, %v664
        %682 = vmatprep.subr.bf16.mxu0 0
        %683 = vmatpush1.bf16.msra.mxu0 %v673
        %684 = vmatprep.subr.bf16.mxu0 0
        %685 = vmatpush1.bf16.msra.mxu0 %v672
        %686 = vmatprep.subr.bf16.mxu0 0
        %687 = vmatpush1.bf16.msra.mxu0 %v671
        %688 = vmatprep.subr.bf16.mxu0 0
        %689 = vmatpush1.bf16.msra.mxu0 %v670
        %690 = vmatprep.subr.bf16.mxu0 0
        %691 = vmatpush1.bf16.msra.mxu0 %v669
        %692 = vmatprep.subr.bf16.mxu0 0
        %693 = vmatpush1.bf16.msra.mxu0 %v668
        %694 = vmatprep.subr.bf16.mxu0 0
        %695 = vmatpush1.bf16.msra.mxu0 %v667
        %696 = vmatprep.subr.bf16.mxu0 0
        %697 = vmatpush1.bf16.msra.mxu0 %v666
        %698 = vmatprep.subr.bf16.mxu0 0
        %699 = vmatpush2.bf16.msra.mxu0 0
        %700 = vmatprep.subr.bf16.mxu0 0
        %701 = vmatpush2.bf16.msra.mxu0 0
        %702 = vmatprep.subr.bf16.mxu0 0
        %703 = vmatpush2.bf16.msra.mxu0 0
        %704 = vmatprep.subr.bf16.mxu0 0
        %705 = vmatpush2.bf16.msra.mxu0 0
        %706 = vmatprep.subr.bf16.mxu0 0
        %707 = vmatpush2.bf16.msra.mxu0 0
        %708 = vmatprep.subr.bf16.mxu0 0
        %709 = vmatpush2.bf16.msra.mxu0 0
        %710 = vmatprep.subr.bf16.mxu0 0
        %711 = vmatpush2.bf16.msra.mxu0 0
        %712 = vmatprep.subr.bf16.mxu0 0
        %713 = vmatpush2.bf16.msra.mxu0 0
        %714 = vmatprep.mubr.bf16.mxu0 0
        %715 = vmatmul.mubr.bf16.gmra.mxu0 %v617
        %v716 = vpop.f32.mrf.mxu0
        %v717 = vadd.f32 0.0, %v716
        %v718 = vpop.f32.mrf.mxu0
        %v719 = vpop.f32.mrf.mxu0
        %v720 = vpop.f32.mrf.mxu0
        %721 = vdwg.mxu0
        %v722 = vadd.f32 %v502, %v717
        %v723 = vmul.f32 %v722, %v722
        %724 = vadd.xlane.f32.xlu0 %v723
        %v725 = vpop.xlane.xlu0 %724
        %v726 = vadd.f32 %v725, 1e-12
        %v727 = vrsqrt.pop %v726
        %v728 = vmul.f32 %v722, %v727
        %s729 = sld [smem:[#allocation3]]
        %v730 = vpack.c.bf16 %v728, %v728
        %731 = vmatprep.subr.bf16.mxu0 0
        %732 = vmatpush1.bf16.msra.mxu0 %v553
        %733 = vmatprep.subr.bf16.mxu0 0
        %734 = vmatpush1.bf16.msra.mxu0 %v552
        %735 = vmatprep.subr.bf16.mxu0 0
        %736 = vmatpush1.bf16.msra.mxu0 %v551
        %737 = vmatprep.subr.bf16.mxu0 0
        %738 = vmatpush1.bf16.msra.mxu0 %v550
        %739 = vmatprep.subr.bf16.mxu0 0
        %740 = vmatpush1.bf16.msra.mxu0 %v549
        %741 = vmatprep.subr.bf16.mxu0 0
        %742 = vmatpush1.bf16.msra.mxu0 %v548
        %743 = vmatprep.subr.bf16.mxu0 0
        %744 = vmatpush1.bf16.msra.mxu0 %v547
        %745 = vmatprep.subr.bf16.mxu0 0
        %746 = vmatpush1.bf16.msra.mxu0 %v546
        %747 = vmatprep.subr.bf16.mxu0 0
        %748 = vmatpush2.bf16.msra.mxu0 0
        %749 = vmatprep.subr.bf16.mxu0 0
        %750 = vmatpush2.bf16.msra.mxu0 0
        %751 = vmatprep.subr.bf16.mxu0 0
        %752 = vmatpush2.bf16.msra.mxu0 0
        %753 = vmatprep.subr.bf16.mxu0 0
        %754 = vmatpush2.bf16.msra.mxu0 0
        %755 = vmatprep.subr.bf16.mxu0 0
        %756 = vmatpush2.bf16.msra.mxu0 0
        %757 = vmatprep.subr.bf16.mxu0 0
        %758 = vmatpush2.bf16.msra.mxu0 0
        %759 = vmatprep.subr.bf16.mxu0 0
        %760 = vmatpush2.bf16.msra.mxu0 0
        %761 = vmatprep.subr.bf16.mxu0 0
        %762 = vmatpush2.bf16.msra.mxu0 0
        %763 = vmatprep.mubr.bf16.mxu0 0
        %764 = vmatmul.mubr.bf16.gmra.mxu0 %v730
        %v765 = vpop.f32.mrf.mxu0
        %v766 = vadd.f32 0.0, %v765
        %v767 = vpop.f32.mrf.mxu0
        %v768 = vpop.f32.mrf.mxu0
        %v769 = vpop.f32.mrf.mxu0
        %770 = vdwg.mxu0
        %v771 = vstv %s729
        %v772 = vmul.f32 %v771, %v766
        %773 = vst [vmem:[%s313] sm:$0xff] %v772
        %s774 = sand.u32 %s166, 1
        %s775 = scalar_lea.sflag [#allocation6], %s774
        %s776 = sand.u32 %s166, 1
        %s777 = smul.addr %s776, 8
        %s778 = scalar_lea.vmem [#allocation12], %s777
        // Predicated region
        $region61: #{tpu_custom_call.1} parent=43 // pred_check
          %p779 = pneg %p176
        $region62: #{tpu_custom_call.1} parent=43 // pred_check_branch
          %781 = sbr.rel (%p779) target = $region64
        $region63: #{tpu_custom_call.1} parent=43 // pred_region
          %s783 = ssub.s32 128, 128
          %784 = vsyncadd %s775, %s783
          %s785 = smul.addr %s27, 128
          %s786 = scalar_lea.hbm %s6, %s785
          %s788 = sshll.u32 %s778, 4
          %s789 = int_to_ptr.vmem [resolvable:$true] %s788
          %791 = dma.vmem_to_hbm [thread:$0]  %s789, 128, %s786, %s775
        $region64: #{tpu_custom_call.1} parent=43 // pred_fallthru
          _
      $region44: #{tpu_custom_call.1} parent=5 // pred_fallthru
        _
      %p792 = scmp.le.s32.totalorder 2, %s22
      // Predicated region
      $region65: #{tpu_custom_call.1} parent=5 // pred_check
        %p793 = pneg %p792
      $region66: #{tpu_custom_call.1} parent=5 // pred_check_branch
        %795 = sbr.rel (%p793) target = $region68
      $region67: #{tpu_custom_call.1} parent=5 // pred_region
        %s796 = ssub.s32 %s22, 2
        // Predicated region
        $region69: #{tpu_custom_call.1} parent=67 // pred_check
          %p797 = pneg %p182
        $region70: #{tpu_custom_call.1} parent=67 // pred_check_branch
          %799 = sbr.rel (%p797) target = $region72
        $region71: #{tpu_custom_call.1} parent=67 // pred_region
          %s800 = sand.u32 %s167, 1
          %s801 = scalar_lea.sflag [#allocation6], %s800
          %s802 = sand.u32 %s167, 1
          %s803 = smul.addr %s802, 8
          %s804 = scalar_lea.vmem [#allocation12], %s803
          %805 = dma.done %s801, 128
        $region72: #{tpu_custom_call.1} parent=67 // pred_fallthru
          _
      $region68: #{tpu_custom_call.1} parent=5 // pred_fallthru
        _
    $region6: #{tpu_custom_call.1} parent=1 // loop_footer
      %s26 = sadd.s32 1, %s22
    $region7: #{tpu_custom_call.1} parent=1 // loop_footer_branch
      %21 = sbr.rel target = $region3
    $region8: #{tpu_custom_call.1} parent=1 // loop_exit
      _
    %806 = vsyncpa [#allocation5], 1
    %s807 = scalar_lea.sflag [#allocation5], 1
    %808 = vsyncpa %s807, 1
    %809 = vsyncpa [#allocation8], 1
    %810 = vsyncpa [#allocation11], 1
    %811 = vsyncpa [#allocation6], 1
    %s812 = scalar_lea.sflag [#allocation6], 1
    %813 = vsyncpa %s812, 1

</llo_original>
